<compile_context>
chip_gen: v7x
topology: tpu7x:2x2x1
jax: 0.10.0
libtpu: 0.0.40
codegen_flags: <defaults>
</compile_context>

<pallas_src>
import functools

import jax
import jax.numpy as jnp
from jax.experimental import pallas as pl
from jax.experimental.pallas import tpu as pltpu

_LANE = 128
_SUBLANE = 8


def _round_up(n, m):
    return (n + m - 1) // m * m


def _drebin3_kernel(x_ref,
                    w1_ref, b1_ref,
                    w2_ref, b2_ref,
                    w3_ref, b3_ref,
                    w4_ref, b4_ref,
                    o_ref):
    # fc1 + tanh
    h = jnp.dot(x_ref[...], w1_ref[...], preferred_element_type=jnp.float32)
    h = jnp.tanh(h + b1_ref[...])
    # fc2 + tanh
    h = jnp.dot(h, w2_ref[...], preferred_element_type=jnp.float32)
    h = jnp.tanh(h + b2_ref[...])
    # fc3 + tanh
    h = jnp.dot(h, w3_ref[...], preferred_element_type=jnp.float32)
    h = jnp.tanh(h + b3_ref[...])
    # fc4 (no activation)
    out = jnp.dot(h, w4_ref[...], preferred_element_type=jnp.float32)
    o_ref[...] = (out + b4_ref[...]).astype(o_ref.dtype)


@functools.partial(jax.jit, static_argnames=("block_b",))
def drebin_net3_forward(x, params, *, block_b=1024):
    """Fused forward pass of DrebinNet3 with a batch-tiled grid.

    Args:
      x: (B, input_size) float32.
      params: dict with w1..w4 of shape (in, out) and b1..b4 of shape (1, out).
      block_b: max batch-tile rows per grid step (static).
    Returns:
      (B, 2) float32 logits.
    """
    B, F = x.shape
    out_dim = params["w4"].shape[1]

    # ---- lane-align all feature / hidden / output dims (zero padding) ----
    Fp = _round_up(F, _LANE)
    H1p = _round_up(params["w1"].shape[1], _LANE)
    H2p = _round_up(params["w2"].shape[1], _LANE)
    H3p = _round_up(params["w3"].shape[1], _LANE)
    Op = _round_up(out_dim, _LANE)

    def pad2(a, rows, cols):
        return jnp.pad(a, ((0, rows - a.shape[0]), (0, cols - a.shape[1])))

    w1 = pad2(params["w1"], Fp, H1p)
    b1 = pad2(params["b1"], 1, H1p)
    w2 = pad2(params["w2"], H1p, H2p)
    b2 = pad2(params["b2"], 1, H2p)
    w3 = pad2(params["w3"], H2p, H3p)
    b3 = pad2(params["b3"], 1, H3p)
    w4 = pad2(params["w4"], H3p, Op)
    b4 = pad2(params["b4"], 1, Op)

    # ---- batch tiling: pad B up to a multiple of the tile (and of 8) ----
    tb = min(block_b, _round_up(B, _SUBLANE))
    Bp = _round_up(B, tb)
    xp = pad2(x.astype(jnp.float32), Bp, Fp)

    grid = (Bp // tb,)

    x_spec = pl.BlockSpec((tb, Fp), lambda i: (i, 0))
    o_spec = pl.BlockSpec((tb, Op), lambda i: (i, 0))

    def resident(shape):
        # Whole array, same block every grid step -> stays VMEM-resident.
        return pl.BlockSpec(shape, lambda i: (0, 0))

    # Advisory cost hint for the XLA scheduler around the custom call.
    flops = 2 * Bp * (Fp * H1p + H1p * H2p + H2p * H3p + H3p * Op)
    transcendentals = Bp * (H1p + H2p + H3p)
    bytes_accessed = 4 * (Bp * Fp + Bp * Op
                          + Fp * H1p + H1p * H2p + H2p * H3p + H3p * Op
                          + H1p + H2p + H3p + Op)

    out_padded = pl.pallas_call(
        _drebin3_kernel,
        out_shape=jax.ShapeDtypeStruct((Bp, Op), jnp.float32),
        grid=grid,
        in_specs=[
            x_spec,
            resident((Fp, H1p)), resident((1, H1p)),
            resident((H1p, H2p)), resident((1, H2p)),
            resident((H2p, H3p)), resident((1, H3p)),
            resident((H3p, Op)), resident((1, Op)),
        ],
        out_specs=o_spec,
        compiler_params=pltpu.CompilerParams(
            dimension_semantics=("parallel",),
            vmem_limit_bytes=32 * 1024 * 1024,
        ),
        cost_estimate=pl.CostEstimate(
            flops=flops,
            transcendentals=transcendentals,
            bytes_accessed=bytes_accessed,
        ),
    )(xp, w1, b1, w2, b2, w3, b3, w4, b4)

    # Strip batch + lane padding back to the real logits.
    return out_padded[:B, :out_dim]


def init_drebin3_params(key, input_size=991, fc1=100, fc2=100, fc3=100):
    """Deterministic init mimicking nn.Linear's U(-1/sqrt(fan_in), 1/sqrt(fan_in))."""
    dims = [(input_size, fc1), (fc1, fc2), (fc2, fc3), (fc3, 2)]
    params = {}
    keys = jax.random.split(key, 2 * len(dims))
    for i, (fan_in, fan_out) in enumerate(dims):
        bound = 1.0 / (fan_in ** 0.5)
        w = jax.random.uniform(keys[2 * i], (fan_in, fan_out),
                               minval=-bound, maxval=bound, dtype=jnp.float32)
        b = jax.random.uniform(keys[2 * i + 1], (1, fan_out),
                               minval=-bound, maxval=bound, dtype=jnp.float32)
        params[f"w{i + 1}"] = w
        params[f"b{i + 1}"] = b
    return params


def _reference_forward(x, p):
    h = jnp.tanh(x @ p["w1"] + p["b1"])
    h = jnp.tanh(h @ p["w2"] + p["b2"])
    h = jnp.tanh(h @ p["w3"] + p["b3"])
    return h @ p["w4"] + p["b4"]


if __name__ == "__main__":
    key = jax.random.PRNGKey(0)
    k_params, k_x = jax.random.split(key)

    input_size = 991   # DrebinNet3 default
    batch = 2

    params = init_drebin3_params(k_params, input_size=input_size)
    x = jax.random.normal(k_x, (batch, input_size), dtype=jnp.float32)

    out = drebin_net3_forward(x, params)
    out = jax.block_until_ready(out)

    ref = _reference_forward(x, params)
    assert out.shape == (batch, 2), out.shape
    assert jnp.allclose(out, ref, atol=1e-4, rtol=1e-4), "mismatch vs reference"

    print("KERNEL_OK")
</pallas_src>

<mosaic_0001>
module attributes {stable_mosaic.version = 11 : i64} {
  func.func @_drebin3_kernel(%arg0: i32, %arg1: memref<8x1024xf32, #tpu.memory_space<vmem>>, %arg2: memref<1024x128xf32, #tpu.memory_space<vmem>>, %arg3: memref<1x128xf32, #tpu.memory_space<vmem>>, %arg4: memref<128x128xf32, #tpu.memory_space<vmem>>, %arg5: memref<1x128xf32, #tpu.memory_space<vmem>>, %arg6: memref<128x128xf32, #tpu.memory_space<vmem>>, %arg7: memref<1x128xf32, #tpu.memory_space<vmem>>, %arg8: memref<128x128xf32, #tpu.memory_space<vmem>>, %arg9: memref<1x128xf32, #tpu.memory_space<vmem>>, %arg10: memref<8x128xf32, #tpu.memory_space<vmem>>) attributes {dimension_semantics = [#tpu.dimension_semantics<parallel>], iteration_bounds = array<i64: 1>, scalar_prefetch = 0 : i64, scratch_operands = 0 : i64, tpu.core_type = #tpu.core_type<tc>, window_params = [{transform_indices = @transform_0, window_bounds = array<i64: 8, 1024>}, {pipeline_mode = #tpu.pipeline_mode<synchronous>, transform_indices = @transform_1, window_bounds = array<i64: 1024, 128>}, {pipeline_mode = #tpu.pipeline_mode<synchronous>, transform_indices = @transform_2, window_bounds = array<i64: 1, 128>}, {pipeline_mode = #tpu.pipeline_mode<synchronous>, transform_indices = @transform_3, window_bounds = array<i64: 128, 128>}, {pipeline_mode = #tpu.pipeline_mode<synchronous>, transform_indices = @transform_4, window_bounds = array<i64: 1, 128>}, {pipeline_mode = #tpu.pipeline_mode<synchronous>, transform_indices = @transform_5, window_bounds = array<i64: 128, 128>}, {pipeline_mode = #tpu.pipeline_mode<synchronous>, transform_indices = @transform_6, window_bounds = array<i64: 1, 128>}, {pipeline_mode = #tpu.pipeline_mode<synchronous>, transform_indices = @transform_7, window_bounds = array<i64: 128, 128>}, {pipeline_mode = #tpu.pipeline_mode<synchronous>, transform_indices = @transform_8, window_bounds = array<i64: 1, 128>}, {transform_indices = @transform_9, window_bounds = array<i64: 8, 128>}]} {
    %c0 = arith.constant 0 : index
    %c0_0 = arith.constant 0 : index
    %0 = vector.load %arg1[%c0, %c0_0] : memref<8x1024xf32, #tpu.memory_space<vmem>>, vector<8x1024xf32>
    %c0_1 = arith.constant 0 : index
    %c0_2 = arith.constant 0 : index
    %1 = vector.load %arg2[%c0_1, %c0_2] : memref<1024x128xf32, #tpu.memory_space<vmem>>, vector<1024x128xf32>
    %cst = arith.constant dense<0.000000e+00> : vector<8x128xf32>
    %2 = tpu.matmul %0, %1, %cst {dimension_numbers = #tpu.dot_dimension_numbers<[1], [0], [0], [1], [0, 0, 1, 1], [], []>} : vector<8x1024xf32>, vector<1024x128xf32>, vector<8x128xf32> -> vector<8x128xf32>
    %c0_3 = arith.constant 0 : index
    %c0_4 = arith.constant 0 : index
    %3 = vector.load %arg3[%c0_3, %c0_4] : memref<1x128xf32, #tpu.memory_space<vmem>>, vector<1x128xf32>
    %4 = vector.broadcast %3 : vector<1x128xf32> to vector<8x128xf32>
    %5 = arith.addf %2, %4 : vector<8x128xf32>
    %6 = math.tanh %5 : vector<8x128xf32>
    %c0_5 = arith.constant 0 : index
    %c0_6 = arith.constant 0 : index
    %7 = vector.load %arg4[%c0_5, %c0_6] : memref<128x128xf32, #tpu.memory_space<vmem>>, vector<128x128xf32>
    %cst_7 = arith.constant dense<0.000000e+00> : vector<8x128xf32>
    %8 = tpu.matmul %6, %7, %cst_7 {dimension_numbers = #tpu.dot_dimension_numbers<[1], [0], [0], [1], [0, 0, 1, 1], [], []>} : vector<8x128xf32>, vector<128x128xf32>, vector<8x128xf32> -> vector<8x128xf32>
    %c0_8 = arith.constant 0 : index
    %c0_9 = arith.constant 0 : index
    %9 = vector.load %arg5[%c0_8, %c0_9] : memref<1x128xf32, #tpu.memory_space<vmem>>, vector<1x128xf32>
    %10 = vector.broadcast %9 : vector<1x128xf32> to vector<8x128xf32>
    %11 = arith.addf %8, %10 : vector<8x128xf32>
    %12 = math.tanh %11 : vector<8x128xf32>
    %c0_10 = arith.constant 0 : index
    %c0_11 = arith.constant 0 : index
    %13 = vector.load %arg6[%c0_10, %c0_11] : memref<128x128xf32, #tpu.memory_space<vmem>>, vector<128x128xf32>
    %cst_12 = arith.constant dense<0.000000e+00> : vector<8x128xf32>
    %14 = tpu.matmul %12, %13, %cst_12 {dimension_numbers = #tpu.dot_dimension_numbers<[1], [0], [0], [1], [0, 0, 1, 1], [], []>} : vector<8x128xf32>, vector<128x128xf32>, vector<8x128xf32> -> vector<8x128xf32>
    %c0_13 = arith.constant 0 : index
    %c0_14 = arith.constant 0 : index
    %15 = vector.load %arg7[%c0_13, %c0_14] : memref<1x128xf32, #tpu.memory_space<vmem>>, vector<1x128xf32>
    %16 = vector.broadcast %15 : vector<1x128xf32> to vector<8x128xf32>
    %17 = arith.addf %14, %16 : vector<8x128xf32>
    %18 = math.tanh %17 : vector<8x128xf32>
    %c0_15 = arith.constant 0 : index
    %c0_16 = arith.constant 0 : index
    %19 = vector.load %arg8[%c0_15, %c0_16] : memref<128x128xf32, #tpu.memory_space<vmem>>, vector<128x128xf32>
    %cst_17 = arith.constant dense<0.000000e+00> : vector<8x128xf32>
    %20 = tpu.matmul %18, %19, %cst_17 {dimension_numbers = #tpu.dot_dimension_numbers<[1], [0], [0], [1], [0, 0, 1, 1], [], []>} : vector<8x128xf32>, vector<128x128xf32>, vector<8x128xf32> -> vector<8x128xf32>
    %c0_18 = arith.constant 0 : index
    %c0_19 = arith.constant 0 : index
    %21 = vector.load %arg9[%c0_18, %c0_19] : memref<1x128xf32, #tpu.memory_space<vmem>>, vector<1x128xf32>
    %22 = vector.broadcast %21 : vector<1x128xf32> to vector<8x128xf32>
    %23 = arith.addf %20, %22 : vector<8x128xf32>
    %c0_20 = arith.constant 0 : index
    %c0_21 = arith.constant 0 : index
    %24 = vector.load %arg10[%c0_20, %c0_21] : memref<8x128xf32, #tpu.memory_space<vmem>>, vector<8x128xf32>
    tpu.vector_store %arg10[%c0_20, %c0_21], %23 {strides = array<i32>} : memref<8x128xf32, #tpu.memory_space<vmem>>, vector<8x128xf32>,
    return
  }
  func.func @transform_0(%arg0: i32) -> (i32, i32) {
    %c0_i32 = arith.constant 0 : i32
    %c0_i32_0 = arith.constant 0 : i32
    return %arg0, %c0_i32 : i32, i32
  }
  func.func @transform_1(%arg0: i32) -> (i32, i32) {
    %c0_i32 = arith.constant 0 : i32
    %c0_i32_0 = arith.constant 0 : i32
    %c0_i32_1 = arith.constant 0 : i32
    return %c0_i32, %c0_i32_0 : i32, i32
  }
  func.func @transform_2(%arg0: i32) -> (i32, i32) {
    %c0_i32 = arith.constant 0 : i32
    %c0_i32_0 = arith.constant 0 : i32
    %c0_i32_1 = arith.constant 0 : i32
    return %c0_i32, %c0_i32_0 : i32, i32
  }
  func.func @transform_3(%arg0: i32) -> (i32, i32) {
    %c0_i32 = arith.constant 0 : i32
    %c0_i32_0 = arith.constant 0 : i32
    %c0_i32_1 = arith.constant 0 : i32
    return %c0_i32, %c0_i32_0 : i32, i32
  }
  func.func @transform_4(%arg0: i32) -> (i32, i32) {
    %c0_i32 = arith.constant 0 : i32
    %c0_i32_0 = arith.constant 0 : i32
    %c0_i32_1 = arith.constant 0 : i32
    return %c0_i32, %c0_i32_0 : i32, i32
  }
  func.func @transform_5(%arg0: i32) -> (i32, i32) {
    %c0_i32 = arith.constant 0 : i32
    %c0_i32_0 = arith.constant 0 : i32
    %c0_i32_1 = arith.constant 0 : i32
    return %c0_i32, %c0_i32_0 : i32, i32
  }
  func.func @transform_6(%arg0: i32) -> (i32, i32) {
    %c0_i32 = arith.constant 0 : i32
    %c0_i32_0 = arith.constant 0 : i32
    %c0_i32_1 = arith.constant 0 : i32
    return %c0_i32, %c0_i32_0 : i32, i32
  }
  func.func @transform_7(%arg0: i32) -> (i32, i32) {
    %c0_i32 = arith.constant 0 : i32
    %c0_i32_0 = arith.constant 0 : i32
    %c0_i32_1 = arith.constant 0 : i32
    return %c0_i32, %c0_i32_0 : i32, i32
  }
  func.func @transform_8(%arg0: i32) -> (i32, i32) {
    %c0_i32 = arith.constant 0 : i32
    %c0_i32_0 = arith.constant 0 : i32
    %c0_i32_1 = arith.constant 0 : i32
    return %c0_i32, %c0_i32_0 : i32, i32
  }
  func.func @transform_9(%arg0: i32) -> (i32, i32) {
    %c0_i32 = arith.constant 0 : i32
    %c0_i32_0 = arith.constant 0 : i32
    return %arg0, %c0_i32 : i32, i32
  }
}

</mosaic_0001>

<llo_original>
// kernel: drebin_net3_forward.1
$region0: #{drebin_net3_forward.1}
  #allocation0 [shape = 'u32[]', space=smem, size = 0x4, offset = 0x4, fixed_abs, tag = 'smem constant byte address 0x4 - core index']
  #allocation1 [shape = 'u32[144,128]{1,0:T(1,128)}', space=vmem, size = 0x12000, scoped, tag = 'internal scratch']
  %s0 = inlined_call_operand.vmem [shape: f32[8,1024], index: 0, kind: input, shape index: {}]
  %s1 = inlined_call_operand.vmem [shape: f32[1024,128], index: 1, kind: input, shape index: {}]
  %s2 = inlined_call_operand.vmem [shape: f32[1,128], index: 2, kind: input, shape index: {}]
  %s3 = inlined_call_operand.vmem [shape: f32[128,128], index: 3, kind: input, shape index: {}]
  %s4 = inlined_call_operand.vmem [shape: f32[1,128], index: 4, kind: input, shape index: {}]
  %s5 = inlined_call_operand.vmem [shape: f32[128,128], index: 5, kind: input, shape index: {}]
  %s6 = inlined_call_operand.vmem [shape: f32[1,128], index: 6, kind: input, shape index: {}]
  %s7 = inlined_call_operand.vmem [shape: f32[128,128], index: 7, kind: input, shape index: {}]
  %s8 = inlined_call_operand.vmem [shape: f32[1,128], index: 8, kind: input, shape index: {}]
  %s9 = inlined_call_operand.vmem [shape: f32[8,128], index: 9, kind: output, shape index: {}]
  %s10 = sld [smem:[#allocation0]]
  $region46: #{drebin_net3_forward.1} parent=0
    _
  %s12 = ssub.s32 1, %s10
  %s13 = scalar_select 0, %s12, %s10
  // Predicated region
  $region2: #{drebin_net3_forward.1} parent=0 // pred_check
    _
  $region3: #{drebin_net3_forward.1} parent=0 // pred_check_branch
    %15 = sbr.rel (0) target = $region5
  $region4: #{drebin_net3_forward.1} parent=0 // pred_region
    _
  $region5: #{drebin_net3_forward.1} parent=0 // pred_fallthru
    _
  // Predicated region
  $region6: #{drebin_net3_forward.1} parent=0 // pred_check
    _
  $region7: #{drebin_net3_forward.1} parent=0 // pred_check_branch
    %17 = sbr.rel (0) target = $region9
  $region8: #{drebin_net3_forward.1} parent=0 // pred_region
    _
  $region9: #{drebin_net3_forward.1} parent=0 // pred_fallthru
    _
  // Predicated region
  $region10: #{drebin_net3_forward.1} parent=0 // pred_check
    _
  $region11: #{drebin_net3_forward.1} parent=0 // pred_check_branch
    %19 = sbr.rel (0) target = $region13
  $region12: #{drebin_net3_forward.1} parent=0 // pred_region
    _
  $region13: #{drebin_net3_forward.1} parent=0 // pred_fallthru
    _
  // Predicated region
  $region14: #{drebin_net3_forward.1} parent=0 // pred_check
    _
  $region15: #{drebin_net3_forward.1} parent=0 // pred_check_branch
    %21 = sbr.rel (0) target = $region17
  $region16: #{drebin_net3_forward.1} parent=0 // pred_region
    _
  $region17: #{drebin_net3_forward.1} parent=0 // pred_fallthru
    _
  // Predicated region
  $region18: #{drebin_net3_forward.1} parent=0 // pred_check
    _
  $region19: #{drebin_net3_forward.1} parent=0 // pred_check_branch
    %23 = sbr.rel (0) target = $region21
  $region20: #{drebin_net3_forward.1} parent=0 // pred_region
    _
  $region21: #{drebin_net3_forward.1} parent=0 // pred_fallthru
    _
  // Predicated region
  $region22: #{drebin_net3_forward.1} parent=0 // pred_check
    _
  $region23: #{drebin_net3_forward.1} parent=0 // pred_check_branch
    %25 = sbr.rel (0) target = $region25
  $region24: #{drebin_net3_forward.1} parent=0 // pred_region
    _
  $region25: #{drebin_net3_forward.1} parent=0 // pred_fallthru
    _
  // Predicated region
  $region26: #{drebin_net3_forward.1} parent=0 // pred_check
    _
  $region27: #{drebin_net3_forward.1} parent=0 // pred_check_branch
    %27 = sbr.rel (0) target = $region29
  $region28: #{drebin_net3_forward.1} parent=0 // pred_region
    _
  $region29: #{drebin_net3_forward.1} parent=0 // pred_fallthru
    _
  // Predicated region
  $region30: #{drebin_net3_forward.1} parent=0 // pred_check
    _
  $region31: #{drebin_net3_forward.1} parent=0 // pred_check_branch
    %29 = sbr.rel (0) target = $region33
  $region32: #{drebin_net3_forward.1} parent=0 // pred_region
    _
  $region33: #{drebin_net3_forward.1} parent=0 // pred_fallthru
    _
  // Predicated region
  $region34: #{drebin_net3_forward.1} parent=0 // pred_check
    _
  $region35: #{drebin_net3_forward.1} parent=0 // pred_check_branch
    %31 = sbr.rel (0) target = $region37
  $region36: #{drebin_net3_forward.1} parent=0 // pred_region
    _
  $region37: #{drebin_net3_forward.1} parent=0 // pred_fallthru
    _
  %v32 = vld [vmem:[%s0] sm:$0xff]
  %v33 = vld [vmem:[%s0 + $0x8] sm:$0xff]
  %v34 = vld [vmem:[%s0 + $0x10] sm:$0xff]
  %v35 = vld [vmem:[%s0 + $0x18] sm:$0xff]
  %v36 = vld [vmem:[%s0 + $0x20] sm:$0xff]
  %v37 = vld [vmem:[%s0 + $0x28] sm:$0xff]
  %v38 = vld [vmem:[%s0 + $0x30] sm:$0xff]
  %v39 = vld [vmem:[%s0 + $0x38] sm:$0xff]
  %v40 = vld [vmem:[%s1] sm:$0xff]
  %v41 = vld [vmem:[%s1 + $0x8] sm:$0xff]
  %v42 = vld [vmem:[%s1 + $0x10] sm:$0xff]
  %v43 = vld [vmem:[%s1 + $0x18] sm:$0xff]
  %v44 = vld [vmem:[%s1 + $0x20] sm:$0xff]
  %v45 = vld [vmem:[%s1 + $0x28] sm:$0xff]
  %v46 = vld [vmem:[%s1 + $0x30] sm:$0xff]
  %v47 = vld [vmem:[%s1 + $0x38] sm:$0xff]
  %v48 = vld [vmem:[%s1 + $0x40] sm:$0xff]
  %v49 = vld [vmem:[%s1 + $0x48] sm:$0xff]
  %v50 = vld [vmem:[%s1 + $0x50] sm:$0xff]
  %v51 = vld [vmem:[%s1 + $0x58] sm:$0xff]
  %v52 = vld [vmem:[%s1 + $0x60] sm:$0xff]
  %v53 = vld [vmem:[%s1 + $0x68] sm:$0xff]
  %v54 = vld [vmem:[%s1 + $0x70] sm:$0xff]
  %v55 = vld [vmem:[%s1 + $0x78] sm:$0xff]
  %v56 = vld [vmem:[%s1 + $0x80] sm:$0xff]
  %v57 = vld [vmem:[%s1 + $0x88] sm:$0xff]
  %v58 = vld [vmem:[%s1 + $0x90] sm:$0xff]
  %v59 = vld [vmem:[%s1 + $0x98] sm:$0xff]
  %v60 = vld [vmem:[%s1 + $0xa0] sm:$0xff]
  %v61 = vld [vmem:[%s1 + $0xa8] sm:$0xff]
  %v62 = vld [vmem:[%s1 + $0xb0] sm:$0xff]
  %v63 = vld [vmem:[%s1 + $0xb8] sm:$0xff]
  %v64 = vld [vmem:[%s1 + $0xc0] sm:$0xff]
  %v65 = vld [vmem:[%s1 + $0xc8] sm:$0xff]
  %v66 = vld [vmem:[%s1 + $0xd0] sm:$0xff]
  %v67 = vld [vmem:[%s1 + $0xd8] sm:$0xff]
  %v68 = vld [vmem:[%s1 + $0xe0] sm:$0xff]
  %v69 = vld [vmem:[%s1 + $0xe8] sm:$0xff]
  %v70 = vld [vmem:[%s1 + $0xf0] sm:$0xff]
  %v71 = vld [vmem:[%s1 + $0xf8] sm:$0xff]
  %v72 = vld [vmem:[%s1 + $0x100] sm:$0xff]
  %v73 = vld [vmem:[%s1 + $0x108] sm:$0xff]
  %v74 = vld [vmem:[%s1 + $0x110] sm:$0xff]
  %v75 = vld [vmem:[%s1 + $0x118] sm:$0xff]
  %v76 = vld [vmem:[%s1 + $0x120] sm:$0xff]
  %v77 = vld [vmem:[%s1 + $0x128] sm:$0xff]
  %v78 = vld [vmem:[%s1 + $0x130] sm:$0xff]
  %v79 = vld [vmem:[%s1 + $0x138] sm:$0xff]
  %v80 = vld [vmem:[%s1 + $0x140] sm:$0xff]
  %v81 = vld [vmem:[%s1 + $0x148] sm:$0xff]
  %v82 = vld [vmem:[%s1 + $0x150] sm:$0xff]
  %v83 = vld [vmem:[%s1 + $0x158] sm:$0xff]
  %v84 = vld [vmem:[%s1 + $0x160] sm:$0xff]
  %v85 = vld [vmem:[%s1 + $0x168] sm:$0xff]
  %v86 = vld [vmem:[%s1 + $0x170] sm:$0xff]
  %v87 = vld [vmem:[%s1 + $0x178] sm:$0xff]
  %v88 = vld [vmem:[%s1 + $0x180] sm:$0xff]
  %v89 = vld [vmem:[%s1 + $0x188] sm:$0xff]
  %v90 = vld [vmem:[%s1 + $0x190] sm:$0xff]
  %v91 = vld [vmem:[%s1 + $0x198] sm:$0xff]
  %v92 = vld [vmem:[%s1 + $0x1a0] sm:$0xff]
  %v93 = vld [vmem:[%s1 + $0x1a8] sm:$0xff]
  %v94 = vld [vmem:[%s1 + $0x1b0] sm:$0xff]
  %v95 = vld [vmem:[%s1 + $0x1b8] sm:$0xff]
  %v96 = vld [vmem:[%s1 + $0x1c0] sm:$0xff]
  %v97 = vld [vmem:[%s1 + $0x1c8] sm:$0xff]
  %v98 = vld [vmem:[%s1 + $0x1d0] sm:$0xff]
  %v99 = vld [vmem:[%s1 + $0x1d8] sm:$0xff]
  %v100 = vld [vmem:[%s1 + $0x1e0] sm:$0xff]
  %v101 = vld [vmem:[%s1 + $0x1e8] sm:$0xff]
  %v102 = vld [vmem:[%s1 + $0x1f0] sm:$0xff]
  %v103 = vld [vmem:[%s1 + $0x1f8] sm:$0xff]
  %v104 = vld [vmem:[%s1 + $0x200] sm:$0xff]
  %v105 = vld [vmem:[%s1 + $0x208] sm:$0xff]
  %v106 = vld [vmem:[%s1 + $0x210] sm:$0xff]
  %v107 = vld [vmem:[%s1 + $0x218] sm:$0xff]
  %v108 = vld [vmem:[%s1 + $0x220] sm:$0xff]
  %v109 = vld [vmem:[%s1 + $0x228] sm:$0xff]
  %v110 = vld [vmem:[%s1 + $0x230] sm:$0xff]
  %v111 = vld [vmem:[%s1 + $0x238] sm:$0xff]
  %v112 = vld [vmem:[%s1 + $0x240] sm:$0xff]
  %v113 = vld [vmem:[%s1 + $0x248] sm:$0xff]
  %v114 = vld [vmem:[%s1 + $0x250] sm:$0xff]
  %v115 = vld [vmem:[%s1 + $0x258] sm:$0xff]
  %v116 = vld [vmem:[%s1 + $0x260] sm:$0xff]
  %v117 = vld [vmem:[%s1 + $0x268] sm:$0xff]
  %v118 = vld [vmem:[%s1 + $0x270] sm:$0xff]
  %v119 = vld [vmem:[%s1 + $0x278] sm:$0xff]
  %v120 = vld [vmem:[%s1 + $0x280] sm:$0xff]
  %v121 = vld [vmem:[%s1 + $0x288] sm:$0xff]
  %v122 = vld [vmem:[%s1 + $0x290] sm:$0xff]
  %v123 = vld [vmem:[%s1 + $0x298] sm:$0xff]
  %v124 = vld [vmem:[%s1 + $0x2a0] sm:$0xff]
  %v125 = vld [vmem:[%s1 + $0x2a8] sm:$0xff]
  %v126 = vld [vmem:[%s1 + $0x2b0] sm:$0xff]
  %v127 = vld [vmem:[%s1 + $0x2b8] sm:$0xff]
  %v128 = vld [vmem:[%s1 + $0x2c0] sm:$0xff]
  %v129 = vld [vmem:[%s1 + $0x2c8] sm:$0xff]
  %v130 = vld [vmem:[%s1 + $0x2d0] sm:$0xff]
  %v131 = vld [vmem:[%s1 + $0x2d8] sm:$0xff]
  %v132 = vld [vmem:[%s1 + $0x2e0] sm:$0xff]
  %v133 = vld [vmem:[%s1 + $0x2e8] sm:$0xff]
  %v134 = vld [vmem:[%s1 + $0x2f0] sm:$0xff]
  %v135 = vld [vmem:[%s1 + $0x2f8] sm:$0xff]
  %v136 = vld [vmem:[%s1 + $0x300] sm:$0xff]
  %v137 = vld [vmem:[%s1 + $0x308] sm:$0xff]
  %v138 = vld [vmem:[%s1 + $0x310] sm:$0xff]
  %v139 = vld [vmem:[%s1 + $0x318] sm:$0xff]
  %v140 = vld [vmem:[%s1 + $0x320] sm:$0xff]
  %v141 = vld [vmem:[%s1 + $0x328] sm:$0xff]
  %v142 = vld [vmem:[%s1 + $0x330] sm:$0xff]
  %v143 = vld [vmem:[%s1 + $0x338] sm:$0xff]
  %v144 = vld [vmem:[%s1 + $0x340] sm:$0xff]
  %v145 = vld [vmem:[%s1 + $0x348] sm:$0xff]
  %v146 = vld [vmem:[%s1 + $0x350] sm:$0xff]
  %v147 = vld [vmem:[%s1 + $0x358] sm:$0xff]
  %v148 = vld [vmem:[%s1 + $0x360] sm:$0xff]
  %v149 = vld [vmem:[%s1 + $0x368] sm:$0xff]
  %v150 = vld [vmem:[%s1 + $0x370] sm:$0xff]
  %v151 = vld [vmem:[%s1 + $0x378] sm:$0xff]
  %v152 = vld [vmem:[%s1 + $0x380] sm:$0xff]
  %v153 = vld [vmem:[%s1 + $0x388] sm:$0xff]
  %v154 = vld [vmem:[%s1 + $0x390] sm:$0xff]
  %v155 = vld [vmem:[%s1 + $0x398] sm:$0xff]
  %v156 = vld [vmem:[%s1 + $0x3a0] sm:$0xff]
  %v157 = vld [vmem:[%s1 + $0x3a8] sm:$0xff]
  %v158 = vld [vmem:[%s1 + $0x3b0] sm:$0xff]
  %v159 = vld [vmem:[%s1 + $0x3b8] sm:$0xff]
  %v160 = vld [vmem:[%s1 + $0x3c0] sm:$0xff]
  %v161 = vld [vmem:[%s1 + $0x3c8] sm:$0xff]
  %v162 = vld [vmem:[%s1 + $0x3d0] sm:$0xff]
  %v163 = vld [vmem:[%s1 + $0x3d8] sm:$0xff]
  %v164 = vld [vmem:[%s1 + $0x3e0] sm:$0xff]
  %v165 = vld [vmem:[%s1 + $0x3e8] sm:$0xff]
  %v166 = vld [vmem:[%s1 + $0x3f0] sm:$0xff]
  %v167 = vld [vmem:[%s1 + $0x3f8] sm:$0xff]
  %v168 = vld [vmem:[%s2] sm:$0x1]
  %v170 = vlaneseq
  %v171 = vshrl.u32 %v170, 7
  %v172 = vsub.s32 0, %v171
  %v173 = vrot.slane %v168, %v172
  %175 = vmatprep.subr.mxu0 0.0
  %176 = vmatpush1.msra.mxu0 %v40
  %177 = vmatprep.subr.mxu0 0.0
  %178 = vmatpush1.msra.mxu0 %v41
  %179 = vmatprep.subr.mxu0 0.0
  %180 = vmatpush1.msra.mxu0 %v42
  %181 = vmatprep.subr.mxu0 0.0
  %182 = vmatpush1.msra.mxu0 %v43
  %183 = vmatprep.subr.mxu0 0.0
  %184 = vmatpush1.msra.mxu0 %v44
  %185 = vmatprep.subr.mxu0 0.0
  %186 = vmatpush1.msra.mxu0 %v45
  %187 = vmatprep.subr.mxu0 0.0
  %188 = vmatpush1.msra.mxu0 %v46
  %189 = vmatprep.subr.mxu0 0.0
  %190 = vmatpush1.msra.mxu0 %v47
  %191 = vmatprep.subr.mxu0 0.0
  %192 = vmatpush1.msra.mxu0 %v48
  %193 = vmatprep.subr.mxu0 0.0
  %194 = vmatpush1.msra.mxu0 %v49
  %195 = vmatprep.subr.mxu0 0.0
  %196 = vmatpush1.msra.mxu0 %v50
  %197 = vmatprep.subr.mxu0 0.0
  %198 = vmatpush1.msra.mxu0 %v51
  %199 = vmatprep.subr.mxu0 0.0
  %200 = vmatpush1.msra.mxu0 %v52
  %201 = vmatprep.subr.mxu0 0.0
  %202 = vmatpush1.msra.mxu0 %v53
  %203 = vmatprep.subr.mxu0 0.0
  %204 = vmatpush1.msra.mxu0 %v54
  %205 = vmatprep.subr.mxu0 0.0
  %206 = vmatpush1.msra.mxu0 %v55
  %207 = vmatprep.subr.mxu0 0.0
  %208 = vmatpush1.msra.mxu0 %v56
  %209 = vmatprep.subr.mxu0 0.0
  %210 = vmatpush1.msra.mxu0 %v57
  %211 = vmatprep.subr.mxu0 0.0
  %212 = vmatpush1.msra.mxu0 %v58
  %213 = vmatprep.subr.mxu0 0.0
  %214 = vmatpush1.msra.mxu0 %v59
  %215 = vmatprep.subr.mxu0 0.0
  %216 = vmatpush1.msra.mxu0 %v60
  %217 = vmatprep.subr.mxu0 0.0
  %218 = vmatpush1.msra.mxu0 %v61
  %219 = vmatprep.subr.mxu0 0.0
  %220 = vmatpush1.msra.mxu0 %v62
  %221 = vmatprep.subr.mxu0 0.0
  %222 = vmatpush1.msra.mxu0 %v63
  %223 = vmatprep.subr.mxu0 0.0
  %224 = vmatpush1.msra.mxu0 %v64
  %225 = vmatprep.subr.mxu0 0.0
  %226 = vmatpush1.msra.mxu0 %v65
  %227 = vmatprep.subr.mxu0 0.0
  %228 = vmatpush1.msra.mxu0 %v66
  %229 = vmatprep.subr.mxu0 0.0
  %230 = vmatpush1.msra.mxu0 %v67
  %231 = vmatprep.subr.mxu0 0.0
  %232 = vmatpush1.msra.mxu0 %v68
  %233 = vmatprep.subr.mxu0 0.0
  %234 = vmatpush1.msra.mxu0 %v69
  %235 = vmatprep.subr.mxu0 0.0
  %236 = vmatpush1.msra.mxu0 %v70
  %237 = vmatprep.subr.mxu0 0.0
  %238 = vmatpush1.msra.mxu0 %v71
  %239 = vmatprep.mubr.f32.mxu0 %v33
  %240 = vmatmul.mubr.f32.gmra.mrb[0].mxu0 %v32
  %v241 = vpop.f32.mrb[0].mxu0
  %v242 = vadd.f32 %v173, %v241
  %v243 = vpop.f32.mrb[0].mxu0
  %244 = vdwg.mxu0
  %245 = vmatprep.subr.mxu0 0.0
  %246 = vmatpush1.msra.mxu0 %v72
  %247 = vmatprep.subr.mxu0 0.0
  %248 = vmatpush1.msra.mxu0 %v73
  %249 = vmatprep.subr.mxu0 0.0
  %250 = vmatpush1.msra.mxu0 %v74
  %251 = vmatprep.subr.mxu0 0.0
  %252 = vmatpush1.msra.mxu0 %v75
  %253 = vmatprep.subr.mxu0 0.0
  %254 = vmatpush1.msra.mxu0 %v76
  %255 = vmatprep.subr.mxu0 0.0
  %256 = vmatpush1.msra.mxu0 %v77
  %257 = vmatprep.subr.mxu0 0.0
  %258 = vmatpush1.msra.mxu0 %v78
  %259 = vmatprep.subr.mxu0 0.0
  %260 = vmatpush1.msra.mxu0 %v79
  %261 = vmatprep.subr.mxu0 0.0
  %262 = vmatpush1.msra.mxu0 %v80
  %263 = vmatprep.subr.mxu0 0.0
  %264 = vmatpush1.msra.mxu0 %v81
  %265 = vmatprep.subr.mxu0 0.0
  %266 = vmatpush1.msra.mxu0 %v82
  %267 = vmatprep.subr.mxu0 0.0
  %268 = vmatpush1.msra.mxu0 %v83
  %269 = vmatprep.subr.mxu0 0.0
  %270 = vmatpush1.msra.mxu0 %v84
  %271 = vmatprep.subr.mxu0 0.0
  %272 = vmatpush1.msra.mxu0 %v85
  %273 = vmatprep.subr.mxu0 0.0
  %274 = vmatpush1.msra.mxu0 %v86
  %275 = vmatprep.subr.mxu0 0.0
  %276 = vmatpush1.msra.mxu0 %v87
  %277 = vmatprep.subr.mxu0 0.0
  %278 = vmatpush1.msra.mxu0 %v88
  %279 = vmatprep.subr.mxu0 0.0
  %280 = vmatpush1.msra.mxu0 %v89
  %281 = vmatprep.subr.mxu0 0.0
  %282 = vmatpush1.msra.mxu0 %v90
  %283 = vmatprep.subr.mxu0 0.0
  %284 = vmatpush1.msra.mxu0 %v91
  %285 = vmatprep.subr.mxu0 0.0
  %286 = vmatpush1.msra.mxu0 %v92
  %287 = vmatprep.subr.mxu0 0.0
  %288 = vmatpush1.msra.mxu0 %v93
  %289 = vmatprep.subr.mxu0 0.0
  %290 = vmatpush1.msra.mxu0 %v94
  %291 = vmatprep.subr.mxu0 0.0
  %292 = vmatpush1.msra.mxu0 %v95
  %293 = vmatprep.subr.mxu0 0.0
  %294 = vmatpush1.msra.mxu0 %v96
  %295 = vmatprep.subr.mxu0 0.0
  %296 = vmatpush1.msra.mxu0 %v97
  %297 = vmatprep.subr.mxu0 0.0
  %298 = vmatpush1.msra.mxu0 %v98
  %299 = vmatprep.subr.mxu0 0.0
  %300 = vmatpush1.msra.mxu0 %v99
  %301 = vmatprep.subr.mxu0 0.0
  %302 = vmatpush1.msra.mxu0 %v100
  %303 = vmatprep.subr.mxu0 0.0
  %304 = vmatpush1.msra.mxu0 %v101
  %305 = vmatprep.subr.mxu0 0.0
  %306 = vmatpush1.msra.mxu0 %v102
  %307 = vmatprep.subr.mxu0 0.0
  %308 = vmatpush1.msra.mxu0 %v103
  %309 = vmatprep.mubr.f32.mxu0 %v35
  %310 = vmatmul.mubr.f32.gmra.mrb[0].mxu0 %v34
  %v311 = vpop.f32.mrb[0].mxu0
  %v312 = vadd.f32 %v242, %v311
  %v313 = vpop.f32.mrb[0].mxu0
  %314 = vdwg.mxu0
  %315 = vmatprep.subr.mxu0 0.0
  %316 = vmatpush1.msra.mxu0 %v104
  %317 = vmatprep.subr.mxu0 0.0
  %318 = vmatpush1.msra.mxu0 %v105
  %319 = vmatprep.subr.mxu0 0.0
  %320 = vmatpush1.msra.mxu0 %v106
  %321 = vmatprep.subr.mxu0 0.0
  %322 = vmatpush1.msra.mxu0 %v107
  %323 = vmatprep.subr.mxu0 0.0
  %324 = vmatpush1.msra.mxu0 %v108
  %325 = vmatprep.subr.mxu0 0.0
  %326 = vmatpush1.msra.mxu0 %v109
  %327 = vmatprep.subr.mxu0 0.0
  %328 = vmatpush1.msra.mxu0 %v110
  %329 = vmatprep.subr.mxu0 0.0
  %330 = vmatpush1.msra.mxu0 %v111
  %331 = vmatprep.subr.mxu0 0.0
  %332 = vmatpush1.msra.mxu0 %v112
  %333 = vmatprep.subr.mxu0 0.0
  %334 = vmatpush1.msra.mxu0 %v113
  %335 = vmatprep.subr.mxu0 0.0
  %336 = vmatpush1.msra.mxu0 %v114
  %337 = vmatprep.subr.mxu0 0.0
  %338 = vmatpush1.msra.mxu0 %v115
  %339 = vmatprep.subr.mxu0 0.0
  %340 = vmatpush1.msra.mxu0 %v116
  %341 = vmatprep.subr.mxu0 0.0
  %342 = vmatpush1.msra.mxu0 %v117
  %343 = vmatprep.subr.mxu0 0.0
  %344 = vmatpush1.msra.mxu0 %v118
  %345 = vmatprep.subr.mxu0 0.0
  %346 = vmatpush1.msra.mxu0 %v119
  %347 = vmatprep.subr.mxu0 0.0
  %348 = vmatpush1.msra.mxu0 %v120
  %349 = vmatprep.subr.mxu0 0.0
  %350 = vmatpush1.msra.mxu0 %v121
  %351 = vmatprep.subr.mxu0 0.0
  %352 = vmatpush1.msra.mxu0 %v122
  %353 = vmatprep.subr.mxu0 0.0
  %354 = vmatpush1.msra.mxu0 %v123
  %355 = vmatprep.subr.mxu0 0.0
  %356 = vmatpush1.msra.mxu0 %v124
  %357 = vmatprep.subr.mxu0 0.0
  %358 = vmatpush1.msra.mxu0 %v125
  %359 = vmatprep.subr.mxu0 0.0
  %360 = vmatpush1.msra.mxu0 %v126
  %361 = vmatprep.subr.mxu0 0.0
  %362 = vmatpush1.msra.mxu0 %v127
  %363 = vmatprep.subr.mxu0 0.0
  %364 = vmatpush1.msra.mxu0 %v128
  %365 = vmatprep.subr.mxu0 0.0
  %366 = vmatpush1.msra.mxu0 %v129
  %367 = vmatprep.subr.mxu0 0.0
  %368 = vmatpush1.msra.mxu0 %v130
  %369 = vmatprep.subr.mxu0 0.0
  %370 = vmatpush1.msra.mxu0 %v131
  %371 = vmatprep.subr.mxu0 0.0
  %372 = vmatpush1.msra.mxu0 %v132
  %373 = vmatprep.subr.mxu0 0.0
  %374 = vmatpush1.msra.mxu0 %v133
  %375 = vmatprep.subr.mxu0 0.0
  %376 = vmatpush1.msra.mxu0 %v134
  %377 = vmatprep.subr.mxu0 0.0
  %378 = vmatpush1.msra.mxu0 %v135
  %379 = vmatprep.mubr.f32.mxu0 %v37
  %380 = vmatmul.mubr.f32.gmra.mrb[0].mxu0 %v36
  %v381 = vpop.f32.mrb[0].mxu0
  %v382 = vadd.f32 %v312, %v381
  %v383 = vpop.f32.mrb[0].mxu0
  %384 = vdwg.mxu0
  %385 = vmatprep.subr.mxu0 0.0
  %386 = vmatpush1.msra.mxu0 %v136
  %387 = vmatprep.subr.mxu0 0.0
  %388 = vmatpush1.msra.mxu0 %v137
  %389 = vmatprep.subr.mxu0 0.0
  %390 = vmatpush1.msra.mxu0 %v138
  %391 = vmatprep.subr.mxu0 0.0
  %392 = vmatpush1.msra.mxu0 %v139
  %393 = vmatprep.subr.mxu0 0.0
  %394 = vmatpush1.msra.mxu0 %v140
  %395 = vmatprep.subr.mxu0 0.0
  %396 = vmatpush1.msra.mxu0 %v141
  %397 = vmatprep.subr.mxu0 0.0
  %398 = vmatpush1.msra.mxu0 %v142
  %399 = vmatprep.subr.mxu0 0.0
  %400 = vmatpush1.msra.mxu0 %v143
  %401 = vmatprep.subr.mxu0 0.0
  %402 = vmatpush1.msra.mxu0 %v144
  %403 = vmatprep.subr.mxu0 0.0
  %404 = vmatpush1.msra.mxu0 %v145
  %405 = vmatprep.subr.mxu0 0.0
  %406 = vmatpush1.msra.mxu0 %v146
  %407 = vmatprep.subr.mxu0 0.0
  %408 = vmatpush1.msra.mxu0 %v147
  %409 = vmatprep.subr.mxu0 0.0
  %410 = vmatpush1.msra.mxu0 %v148
  %411 = vmatprep.subr.mxu0 0.0
  %412 = vmatpush1.msra.mxu0 %v149
  %413 = vmatprep.subr.mxu0 0.0
  %414 = vmatpush1.msra.mxu0 %v150
  %415 = vmatprep.subr.mxu0 0.0
  %416 = vmatpush1.msra.mxu0 %v151
  %417 = vmatprep.subr.mxu0 0.0
  %418 = vmatpush1.msra.mxu0 %v152
  %419 = vmatprep.subr.mxu0 0.0
  %420 = vmatpush1.msra.mxu0 %v153
  %421 = vmatprep.subr.mxu0 0.0
  %422 = vmatpush1.msra.mxu0 %v154
  %423 = vmatprep.subr.mxu0 0.0
  %424 = vmatpush1.msra.mxu0 %v155
  %425 = vmatprep.subr.mxu0 0.0
  %426 = vmatpush1.msra.mxu0 %v156
  %427 = vmatprep.subr.mxu0 0.0
  %428 = vmatpush1.msra.mxu0 %v157
  %429 = vmatprep.subr.mxu0 0.0
  %430 = vmatpush1.msra.mxu0 %v158
  %431 = vmatprep.subr.mxu0 0.0
  %432 = vmatpush1.msra.mxu0 %v159
  %433 = vmatprep.subr.mxu0 0.0
  %434 = vmatpush1.msra.mxu0 %v160
  %435 = vmatprep.subr.mxu0 0.0
  %436 = vmatpush1.msra.mxu0 %v161
  %437 = vmatprep.subr.mxu0 0.0
  %438 = vmatpush1.msra.mxu0 %v162
  %439 = vmatprep.subr.mxu0 0.0
  %440 = vmatpush1.msra.mxu0 %v163
  %441 = vmatprep.subr.mxu0 0.0
  %442 = vmatpush1.msra.mxu0 %v164
  %443 = vmatprep.subr.mxu0 0.0
  %444 = vmatpush1.msra.mxu0 %v165
  %445 = vmatprep.subr.mxu0 0.0
  %446 = vmatpush1.msra.mxu0 %v166
  %447 = vmatprep.subr.mxu0 0.0
  %448 = vmatpush1.msra.mxu0 %v167
  %449 = vmatprep.mubr.f32.mxu0 %v39
  %450 = vmatmul.mubr.f32.gmra.mrb[0].mxu0 %v38
  %v451 = vpop.f32.mrb[0].mxu0
  %v452 = vadd.f32 %v382, %v451
  %v453 = vpop.f32.mrb[0].mxu0
  %454 = vdwg.mxu0
  %v455 = vtanh.pop %v452
  %v456 = vld [vmem:[%s3] sm:$0xff]
  %v457 = vld [vmem:[%s3 + $0x8] sm:$0xff]
  %v458 = vld [vmem:[%s3 + $0x10] sm:$0xff]
  %v459 = vld [vmem:[%s3 + $0x18] sm:$0xff]
  %v460 = vld [vmem:[%s3 + $0x20] sm:$0xff]
  %v461 = vld [vmem:[%s3 + $0x28] sm:$0xff]
  %v462 = vld [vmem:[%s3 + $0x30] sm:$0xff]
  %v463 = vld [vmem:[%s3 + $0x38] sm:$0xff]
  %v464 = vld [vmem:[%s3 + $0x40] sm:$0xff]
  %v465 = vld [vmem:[%s3 + $0x48] sm:$0xff]
  %v466 = vld [vmem:[%s3 + $0x50] sm:$0xff]
  %v467 = vld [vmem:[%s3 + $0x58] sm:$0xff]
  %v468 = vld [vmem:[%s3 + $0x60] sm:$0xff]
  %v469 = vld [vmem:[%s3 + $0x68] sm:$0xff]
  %v470 = vld [vmem:[%s3 + $0x70] sm:$0xff]
  %v471 = vld [vmem:[%s3 + $0x78] sm:$0xff]
  %v472 = vld [vmem:[%s4] sm:$0x1]
  %v474 = vlaneseq
  %v475 = vshrl.u32 %v474, 7
  %v476 = vsub.s32 0, %v475
  %v477 = vrot.slane %v472, %v476
  %479 = vmatprep.subr.mxu0 0.0
  %480 = vmatpush1.msra.mxu0 %v456
  %481 = vmatprep.subr.mxu0 0.0
  %482 = vmatpush1.msra.mxu0 %v457
  %483 = vmatprep.subr.mxu0 0.0
  %484 = vmatpush1.msra.mxu0 %v458
  %485 = vmatprep.subr.mxu0 0.0
  %486 = vmatpush1.msra.mxu0 %v459
  %487 = vmatprep.subr.mxu0 0.0
  %488 = vmatpush1.msra.mxu0 %v460
  %489 = vmatprep.subr.mxu0 0.0
  %490 = vmatpush1.msra.mxu0 %v461
  %491 = vmatprep.subr.mxu0 0.0
  %492 = vmatpush1.msra.mxu0 %v462
  %493 = vmatprep.subr.mxu0 0.0
  %494 = vmatpush1.msra.mxu0 %v463
  %495 = vmatprep.subr.mxu0 0.0
  %496 = vmatpush1.msra.mxu0 %v464
  %497 = vmatprep.subr.mxu0 0.0
  %498 = vmatpush1.msra.mxu0 %v465
  %499 = vmatprep.subr.mxu0 0.0
  %500 = vmatpush1.msra.mxu0 %v466
  %501 = vmatprep.subr.mxu0 0.0
  %502 = vmatpush1.msra.mxu0 %v467
  %503 = vmatprep.subr.mxu0 0.0
  %504 = vmatpush1.msra.mxu0 %v468
  %505 = vmatprep.subr.mxu0 0.0
  %506 = vmatpush1.msra.mxu0 %v469
  %507 = vmatprep.subr.mxu0 0.0
  %508 = vmatpush1.msra.mxu0 %v470
  %509 = vmatprep.subr.mxu0 0.0
  %510 = vmatpush1.msra.mxu0 %v471
  %511 = vmatprep.subr.mxu0 0.0
  %512 = vmatpush1.msra.mxu0 0.0
  %513 = vmatprep.subr.mxu0 0.0
  %514 = vmatpush1.msra.mxu0 0.0
  %515 = vmatprep.subr.mxu0 0.0
  %516 = vmatpush1.msra.mxu0 0.0
  %517 = vmatprep.subr.mxu0 0.0
  %518 = vmatpush1.msra.mxu0 0.0
  %519 = vmatprep.subr.mxu0 0.0
  %520 = vmatpush1.msra.mxu0 0.0
  %521 = vmatprep.subr.mxu0 0.0
  %522 = vmatpush1.msra.mxu0 0.0
  %523 = vmatprep.subr.mxu0 0.0
  %524 = vmatpush1.msra.mxu0 0.0
  %525 = vmatprep.subr.mxu0 0.0
  %526 = vmatpush1.msra.mxu0 0.0
  %527 = vmatprep.subr.mxu0 0.0
  %528 = vmatpush1.msra.mxu0 0.0
  %529 = vmatprep.subr.mxu0 0.0
  %530 = vmatpush1.msra.mxu0 0.0
  %531 = vmatprep.subr.mxu0 0.0
  %532 = vmatpush1.msra.mxu0 0.0
  %533 = vmatprep.subr.mxu0 0.0
  %534 = vmatpush1.msra.mxu0 0.0
  %535 = vmatprep.subr.mxu0 0.0
  %536 = vmatpush1.msra.mxu0 0.0
  %537 = vmatprep.subr.mxu0 0.0
  %538 = vmatpush1.msra.mxu0 0.0
  %539 = vmatprep.subr.mxu0 0.0
  %540 = vmatpush1.msra.mxu0 0.0
  %541 = vmatprep.subr.mxu0 0.0
  %542 = vmatpush1.msra.mxu0 0.0
  %543 = vmatprep.mubr.f32.mxu0 0.0
  %544 = vmatmul.mubr.f32.gmra.mrb[0].mxu0 %v455
  %v545 = vpop.f32.mrb[0].mxu0
  %v546 = vadd.f32 %v477, %v545
  %v547 = vpop.f32.mrb[0].mxu0
  %548 = vdwg.mxu0
  %v549 = vtanh.pop %v546
  %v550 = vld [vmem:[%s5] sm:$0xff]
  %v551 = vld [vmem:[%s5 + $0x8] sm:$0xff]
  %v552 = vld [vmem:[%s5 + $0x10] sm:$0xff]
  %v553 = vld [vmem:[%s5 + $0x18] sm:$0xff]
  %v554 = vld [vmem:[%s5 + $0x20] sm:$0xff]
  %v555 = vld [vmem:[%s5 + $0x28] sm:$0xff]
  %v556 = vld [vmem:[%s5 + $0x30] sm:$0xff]
  %v557 = vld [vmem:[%s5 + $0x38] sm:$0xff]
  %v558 = vld [vmem:[%s5 + $0x40] sm:$0xff]
  %v559 = vld [vmem:[%s5 + $0x48] sm:$0xff]
  %v560 = vld [vmem:[%s5 + $0x50] sm:$0xff]
  %v561 = vld [vmem:[%s5 + $0x58] sm:$0xff]
  %v562 = vld [vmem:[%s5 + $0x60] sm:$0xff]
  %v563 = vld [vmem:[%s5 + $0x68] sm:$0xff]
  %v564 = vld [vmem:[%s5 + $0x70] sm:$0xff]
  %v565 = vld [vmem:[%s5 + $0x78] sm:$0xff]
  %v566 = vld [vmem:[%s6] sm:$0x1]
  %v568 = vlaneseq
  %v569 = vshrl.u32 %v568, 7
  %v570 = vsub.s32 0, %v569
  %v571 = vrot.slane %v566, %v570
  %573 = vmatprep.subr.mxu0 0.0
  %574 = vmatpush1.msra.mxu0 %v550
  %575 = vmatprep.subr.mxu0 0.0
  %576 = vmatpush1.msra.mxu0 %v551
  %577 = vmatprep.subr.mxu0 0.0
  %578 = vmatpush1.msra.mxu0 %v552
  %579 = vmatprep.subr.mxu0 0.0
  %580 = vmatpush1.msra.mxu0 %v553
  %581 = vmatprep.subr.mxu0 0.0
  %582 = vmatpush1.msra.mxu0 %v554
  %583 = vmatprep.subr.mxu0 0.0
  %584 = vmatpush1.msra.mxu0 %v555
  %585 = vmatprep.subr.mxu0 0.0
  %586 = vmatpush1.msra.mxu0 %v556
  %587 = vmatprep.subr.mxu0 0.0
  %588 = vmatpush1.msra.mxu0 %v557
  %589 = vmatprep.subr.mxu0 0.0
  %590 = vmatpush1.msra.mxu0 %v558
  %591 = vmatprep.subr.mxu0 0.0
  %592 = vmatpush1.msra.mxu0 %v559
  %593 = vmatprep.subr.mxu0 0.0
  %594 = vmatpush1.msra.mxu0 %v560
  %595 = vmatprep.subr.mxu0 0.0
  %596 = vmatpush1.msra.mxu0 %v561
  %597 = vmatprep.subr.mxu0 0.0
  %598 = vmatpush1.msra.mxu0 %v562
  %599 = vmatprep.subr.mxu0 0.0
  %600 = vmatpush1.msra.mxu0 %v563
  %601 = vmatprep.subr.mxu0 0.0
  %602 = vmatpush1.msra.mxu0 %v564
  %603 = vmatprep.subr.mxu0 0.0
  %604 = vmatpush1.msra.mxu0 %v565
  %605 = vmatprep.subr.mxu0 0.0
  %606 = vmatpush1.msra.mxu0 0.0
  %607 = vmatprep.subr.mxu0 0.0
  %608 = vmatpush1.msra.mxu0 0.0
  %609 = vmatprep.subr.mxu0 0.0
  %610 = vmatpush1.msra.mxu0 0.0
  %611 = vmatprep.subr.mxu0 0.0
  %612 = vmatpush1.msra.mxu0 0.0
  %613 = vmatprep.subr.mxu0 0.0
  %614 = vmatpush1.msra.mxu0 0.0
  %615 = vmatprep.subr.mxu0 0.0
  %616 = vmatpush1.msra.mxu0 0.0
  %617 = vmatprep.subr.mxu0 0.0
  %618 = vmatpush1.msra.mxu0 0.0
  %619 = vmatprep.subr.mxu0 0.0
  %620 = vmatpush1.msra.mxu0 0.0
  %621 = vmatprep.subr.mxu0 0.0
  %622 = vmatpush1.msra.mxu0 0.0
  %623 = vmatprep.subr.mxu0 0.0
  %624 = vmatpush1.msra.mxu0 0.0
  %625 = vmatprep.subr.mxu0 0.0
  %626 = vmatpush1.msra.mxu0 0.0
  %627 = vmatprep.subr.mxu0 0.0
  %628 = vmatpush1.msra.mxu0 0.0
  %629 = vmatprep.subr.mxu0 0.0
  %630 = vmatpush1.msra.mxu0 0.0
  %631 = vmatprep.subr.mxu0 0.0
  %632 = vmatpush1.msra.mxu0 0.0
  %633 = vmatprep.subr.mxu0 0.0
  %634 = vmatpush1.msra.mxu0 0.0
  %635 = vmatprep.subr.mxu0 0.0
  %636 = vmatpush1.msra.mxu0 0.0
  %637 = vmatprep.mubr.f32.mxu0 0.0
  %638 = vmatmul.mubr.f32.gmra.mrb[0].mxu0 %v549
  %v639 = vpop.f32.mrb[0].mxu0
  %v640 = vadd.f32 %v571, %v639
  %v641 = vpop.f32.mrb[0].mxu0
  %642 = vdwg.mxu0
  %v643 = vtanh.pop %v640
  %v644 = vld [vmem:[%s7] sm:$0xff]
  %v645 = vld [vmem:[%s7 + $0x8] sm:$0xff]
  %v646 = vld [vmem:[%s7 + $0x10] sm:$0xff]
  %v647 = vld [vmem:[%s7 + $0x18] sm:$0xff]
  %v648 = vld [vmem:[%s7 + $0x20] sm:$0xff]
  %v649 = vld [vmem:[%s7 + $0x28] sm:$0xff]
  %v650 = vld [vmem:[%s7 + $0x30] sm:$0xff]
  %v651 = vld [vmem:[%s7 + $0x38] sm:$0xff]
  %v652 = vld [vmem:[%s7 + $0x40] sm:$0xff]
  %v653 = vld [vmem:[%s7 + $0x48] sm:$0xff]
  %v654 = vld [vmem:[%s7 + $0x50] sm:$0xff]
  %v655 = vld [vmem:[%s7 + $0x58] sm:$0xff]
  %v656 = vld [vmem:[%s7 + $0x60] sm:$0xff]
  %v657 = vld [vmem:[%s7 + $0x68] sm:$0xff]
  %v658 = vld [vmem:[%s7 + $0x70] sm:$0xff]
  %v659 = vld [vmem:[%s7 + $0x78] sm:$0xff]
  %v660 = vld [vmem:[%s8] sm:$0x1]
  %v662 = vlaneseq
  %v663 = vshrl.u32 %v662, 7
  %v664 = vsub.s32 0, %v663
  %v665 = vrot.slane %v660, %v664
  %667 = vmatprep.subr.mxu0 0.0
  %668 = vmatpush1.msra.mxu0 %v644
  %669 = vmatprep.subr.mxu0 0.0
  %670 = vmatpush1.msra.mxu0 %v645
  %671 = vmatprep.subr.mxu0 0.0
  %672 = vmatpush1.msra.mxu0 %v646
  %673 = vmatprep.subr.mxu0 0.0
  %674 = vmatpush1.msra.mxu0 %v647
  %675 = vmatprep.subr.mxu0 0.0
  %676 = vmatpush1.msra.mxu0 %v648
  %677 = vmatprep.subr.mxu0 0.0
  %678 = vmatpush1.msra.mxu0 %v649
  %679 = vmatprep.subr.mxu0 0.0
  %680 = vmatpush1.msra.mxu0 %v650
  %681 = vmatprep.subr.mxu0 0.0
  %682 = vmatpush1.msra.mxu0 %v651
  %683 = vmatprep.subr.mxu0 0.0
  %684 = vmatpush1.msra.mxu0 %v652
  %685 = vmatprep.subr.mxu0 0.0
  %686 = vmatpush1.msra.mxu0 %v653
  %687 = vmatprep.subr.mxu0 0.0
  %688 = vmatpush1.msra.mxu0 %v654
  %689 = vmatprep.subr.mxu0 0.0
  %690 = vmatpush1.msra.mxu0 %v655
  %691 = vmatprep.subr.mxu0 0.0
  %692 = vmatpush1.msra.mxu0 %v656
  %693 = vmatprep.subr.mxu0 0.0
  %694 = vmatpush1.msra.mxu0 %v657
  %695 = vmatprep.subr.mxu0 0.0
  %696 = vmatpush1.msra.mxu0 %v658
  %697 = vmatprep.subr.mxu0 0.0
  %698 = vmatpush1.msra.mxu0 %v659
  %699 = vmatprep.subr.mxu0 0.0
  %700 = vmatpush1.msra.mxu0 0.0
  %701 = vmatprep.subr.mxu0 0.0
  %702 = vmatpush1.msra.mxu0 0.0
  %703 = vmatprep.subr.mxu0 0.0
  %704 = vmatpush1.msra.mxu0 0.0
  %705 = vmatprep.subr.mxu0 0.0
  %706 = vmatpush1.msra.mxu0 0.0
  %707 = vmatprep.subr.mxu0 0.0
  %708 = vmatpush1.msra.mxu0 0.0
  %709 = vmatprep.subr.mxu0 0.0
  %710 = vmatpush1.msra.mxu0 0.0
  %711 = vmatprep.subr.mxu0 0.0
  %712 = vmatpush1.msra.mxu0 0.0
  %713 = vmatprep.subr.mxu0 0.0
  %714 = vmatpush1.msra.mxu0 0.0
  %715 = vmatprep.subr.mxu0 0.0
  %716 = vmatpush1.msra.mxu0 0.0
  %717 = vmatprep.subr.mxu0 0.0
  %718 = vmatpush1.msra.mxu0 0.0
  %719 = vmatprep.subr.mxu0 0.0
  %720 = vmatpush1.msra.mxu0 0.0
  %721 = vmatprep.subr.mxu0 0.0
  %722 = vmatpush1.msra.mxu0 0.0
  %723 = vmatprep.subr.mxu0 0.0
  %724 = vmatpush1.msra.mxu0 0.0
  %725 = vmatprep.subr.mxu0 0.0
  %726 = vmatpush1.msra.mxu0 0.0
  %727 = vmatprep.subr.mxu0 0.0
  %728 = vmatpush1.msra.mxu0 0.0
  %729 = vmatprep.subr.mxu0 0.0
  %730 = vmatpush1.msra.mxu0 0.0
  %731 = vmatprep.mubr.f32.mxu0 0.0
  %732 = vmatmul.mubr.f32.gmra.mrb[0].mxu0 %v643
  %v733 = vpop.f32.mrb[0].mxu0
  %v734 = vadd.f32 %v665, %v733
  %v735 = vpop.f32.mrb[0].mxu0
  %736 = vdwg.mxu0
  %737 = vst [vmem:[%s9] sm:$0xff] %v734
  // Predicated region
  $region38: #{drebin_net3_forward.1} parent=0 // pred_check
    _
  $region39: #{drebin_net3_forward.1} parent=0 // pred_check_branch
    %739 = sbr.rel (0) target = $region41
  $region40: #{drebin_net3_forward.1} parent=0 // pred_region
    _
  $region41: #{drebin_net3_forward.1} parent=0 // pred_fallthru
    _
  // Predicated region
  $region42: #{drebin_net3_forward.1} parent=0 // pred_check
    _
  $region43: #{drebin_net3_forward.1} parent=0 // pred_check_branch
    %741 = sbr.rel (0) target = $region45
  $region44: #{drebin_net3_forward.1} parent=0 // pred_region
    _
  $region45: #{drebin_net3_forward.1} parent=0 // pred_fallthru
    _

</llo_original>
